<compile_context>
chip_gen: v6e
topology: v6e:2x2x1
jax: 0.10.0
libtpu: 0.0.40
codegen_flags: <defaults>
</compile_context>

<pallas_src>
import functools

import jax
import jax.numpy as jnp
from jax.experimental import pallas as pl
from jax.experimental.pallas import tpu as pltpu
import numpy as np


def _round_up(x, m):
    return -(-x // m) * m


# ----------------------------------------------------------------------------
# Pallas kernel: per-(batch, frame-tile) fused conv-as-matmul + magnitude + log
# ----------------------------------------------------------------------------
def _lhvqt_kernel(win_ref, w_ref, out_ref):
    # win_ref: (1, 1, hop, tile_t + 128)  chunk-major-on-lanes waveform window
    #                                      (includes the halo chunks)
    # w_ref  : (2*H*F, ks)                 fused real|imag filterbank, transposed
    #                                      (constant index_map -> VMEM resident)
    # out_ref: (1, H*F, tile_t)            log-magnitude, frames on lanes
    hop = win_ref.shape[2]
    ks = w_ref.shape[1]
    hf = w_ref.shape[0] // 2
    tile_t = out_ref.shape[2]
    R = ks // hop

    win = win_ref[0, 0, :, :]                                    # (hop, tile_w)

    # Build the (ks, tile_t) im2col tile once in VMEM.  Row k = q*hop + j of
    # frames^T is chunk (t + q), sample j, i.e. win[j, t + q]: R lane-shifted
    # slices concatenated on sublanes (XLU work, off the VPU/MXU slots).
    frames_t = jnp.concatenate(
        [win[:, q:q + tile_t] for q in range(R)], axis=0)        # (ks, tile_t)

    # Single K=ks MXU contraction, bins-major result -> no output transpose.
    acc = jnp.dot(w_ref[...], frames_t,
                  preferred_element_type=jnp.float32)            # (2*H*F, tile_t)

    real = acc[:hf, :]                                           # sublane slice
    imag = acc[hf:, :]
    # Epilogue in f32 (v5e has no bf16 VPU/EUP); lane-dense unmasked store.
    out_ref[0, :, :] = jnp.log1p(jnp.sqrt(real * real + imag * imag))


def lhvqt_forward(wav, w_real, w_imag, *, hop):
    """wav: (B, 1, T) f32; w_real/w_imag: (H, ks, F) f32 -> (B, H, F, T_out)."""
    B, _, T = wav.shape
    H, ks, F = w_real.shape
    assert ks % hop == 0, "kernel size must be a multiple of the hop length"
    R = ks // hop
    assert R <= 128, "ks/hop must fit inside the 128-chunk halo"
    pad = ks // 2
    T_out = (T + 2 * pad - ks) // hop + 1

    # Frame-tile size: 128-aligned (frames land on lanes), grown up to 1024 so
    # per-step overhead amortizes; footprint at the cap is ~5 MiB, well inside
    # every generation's scoped VMEM default (incl. v7x's 32 MiB of 64 MiB).
    HALO = 128
    tile_t = min(1024, _round_up(T_out, 128))
    n_t = -(-T_out // tile_t)
    T_out_pad = n_t * tile_t
    tile_w = tile_t + HALO

    # ---- input: one pad (conv padding + halo/alignment tail), then lay the
    # hop-sized chunks out chunk-major-on-lanes with per-tile overlap ---------
    n_chunks = n_t * tile_t + HALO
    total = n_chunks * hop
    assert total >= T + 2 * pad
    x = jnp.pad(wav[:, 0, :], ((0, 0), (pad, total - T - pad)))   # (B, total)
    chunks = x.reshape(B, n_chunks, hop)                          # (B, C, hop)

    # Overlapped per-tile windows (tile t covers chunks [t*tile_t, +tile_w)).
    idx = (jnp.arange(n_t) * tile_t)[:, None] + jnp.arange(tile_w)[None, :]
    slabs = jnp.take(chunks, idx, axis=1)                         # (B, n_t, tile_w, hop)
    slabs = jnp.transpose(slabs, (0, 1, 3, 2))                    # (B, n_t, hop, tile_w)

    # ---- weights: fuse harmonics + real/imag, transposed to (2*H*F, ks) -----
    wr = jnp.transpose(w_real, (0, 2, 1)).reshape(H * F, ks)
    wi = jnp.transpose(w_imag, (0, 2, 1)).reshape(H * F, ks)
    w_fused_t = jnp.concatenate([wr, wi], axis=0)                 # (2*H*F, ks)

    out = pl.pallas_call(
        _lhvqt_kernel,
        out_shape=jax.ShapeDtypeStruct((B, H * F, T_out_pad), jnp.float32),
        grid_spec=pltpu.PrefetchScalarGridSpec(
            num_scalar_prefetch=0,
            grid=(B, n_t),
            in_specs=[
                # one lane-dense chunk window per step (halo already inside)
                pl.BlockSpec((1, 1, hop, tile_w), lambda b, t: (b, t, 0, 0)),
                # fused filterbank: constant index -> resident, no re-DMA
                pl.BlockSpec((2 * H * F, ks), lambda b, t: (0, 0)),
            ],
            out_specs=pl.BlockSpec((1, H * F, tile_t), lambda b, t: (b, 0, t)),
        ),
        compiler_params=pltpu.CompilerParams(
            dimension_semantics=("parallel", "parallel")),
    )(slabs, w_fused_t)

    # (B, H*F, T_out_pad) -> (B, H, F, T_out): reshape is free, slice drops the
    # frame padding.  [PyTorch LHVQT output layout]
    return out.reshape(B, H, F, T_out_pad)[..., :T_out]


# ----------------------------------------------------------------------------
# Deterministic VQT-style filterbank init (complex sinusoids, Hann window)
# ----------------------------------------------------------------------------
def make_filterbank(harmonics, fmin, n_bins, bins_per_octave, ks, sr):
    taps = np.arange(ks, dtype=np.float64)
    window = 0.5 - 0.5 * np.cos(2.0 * np.pi * taps / max(ks - 1, 1))  # Hann
    w_real = np.zeros((len(harmonics), ks, n_bins), dtype=np.float32)
    w_imag = np.zeros((len(harmonics), ks, n_bins), dtype=np.float32)
    for h, harm in enumerate(sorted(harmonics)):
        f0 = harm * fmin
        for b in range(n_bins):
            freq = f0 * (2.0 ** (b / bins_per_octave))
            phase = 2.0 * np.pi * freq * taps / sr
            w_real[h, :, b] = (window * np.cos(phase) / ks).astype(np.float32)
            w_imag[h, :, b] = (window * np.sin(phase) / ks).astype(np.float32)
    return jnp.asarray(w_real), jnp.asarray(w_imag)


# ----------------------------------------------------------------------------
# Pure-JAX reference (for correctness check of the kernel hot path)
# ----------------------------------------------------------------------------
def lhvqt_reference(wav, w_real, w_imag, *, hop):
    B, _, T = wav.shape
    H, ks, F = w_real.shape
    pad = ks // 2
    T_out = (T + 2 * pad - ks) // hop + 1
    x = jnp.pad(wav[:, 0, :], ((0, 0), (pad, pad)))
    idx = hop * jnp.arange(T_out)[:, None] + jnp.arange(ks)[None, :]
    frames = x[:, idx]                                          # (B, T_out, ks)
    real = jnp.einsum('btk,hkf->bhtf', frames, w_real)
    imag = jnp.einsum('btk,hkf->bhtf', frames, w_imag)
    feats = jnp.log1p(jnp.sqrt(real * real + imag * imag))
    return jnp.transpose(feats, (0, 1, 3, 2))


if __name__ == "__main__":
    # Small, module-consistent shapes.
    B = 2                      # batch
    T = 512                    # audio samples
    harmonics = [0.5, 1, 2, 4] # H = 4
    n_bins = 32                # F   (H * F = 128 -> lane-dense bins axis)
    bins_per_octave = 12
    ks = 64                    # time-conv kernel size
    hop = 16                   # conv stride (hop length)
    sr = 2000.0
    fmin = 32.70               # ~C1

    key = jax.random.PRNGKey(0)
    wav = jax.random.normal(key, (B, 1, T), dtype=jnp.float32)

    w_real, w_imag = make_filterbank(harmonics, fmin, n_bins,
                                     bins_per_octave, ks, sr)

    fwd = jax.jit(functools.partial(lhvqt_forward, hop=hop))
    feats = fwd(wav, w_real, w_imag)
    feats = jax.block_until_ready(feats)

    ref = lhvqt_reference(wav, w_real, w_imag, hop=hop)
    T_out = (T + 2 * (ks // 2) - ks) // hop + 1
    assert feats.shape == (B, len(harmonics), n_bins, T_out), feats.shape
    np.testing.assert_allclose(np.asarray(feats), np.asarray(ref),
                               rtol=1e-4, atol=1e-4)

    print("KERNEL_OK")
</pallas_src>

<mosaic_0001>
module attributes {stable_mosaic.version = 11 : i64} {
  func.func @_lhvqt_kernel(%arg0: i32, %arg1: i32, %arg2: memref<1x1x16x256xf32, #tpu.memory_space<vmem>>, %arg3: memref<256x64xf32, #tpu.memory_space<vmem>>, %arg4: memref<1x128x128xf32, #tpu.memory_space<vmem>>) attributes {dimension_semantics = [#tpu.dimension_semantics<parallel>, #tpu.dimension_semantics<parallel>], iteration_bounds = array<i64: 2, 1>, scalar_prefetch = 0 : i64, scratch_operands = 0 : i64, tpu.core_type = #tpu.core_type<tc>, window_params = [{transform_indices = @transform_0, window_bounds = array<i64: 1, 1, 16, 256>}, {pipeline_mode = #tpu.pipeline_mode<synchronous>, transform_indices = @transform_1, window_bounds = array<i64: 256, 64>}, {transform_indices = @transform_2, window_bounds = array<i64: 1, 128, 128>}]} {
    %c0 = arith.constant 0 : index
    %c0_0 = arith.constant 0 : index
    %c0_1 = arith.constant 0 : index
    %c0_2 = arith.constant 0 : index
    %0 = vector.load %arg2[%c0, %c0_0, %c0_1, %c0_2] : memref<1x1x16x256xf32, #tpu.memory_space<vmem>>, vector<1x1x16x256xf32>
    %1 = vector.shape_cast %0 : vector<1x1x16x256xf32> to vector<16x256xf32>
    %2 = vector.extract_strided_slice %1 {offsets = [0, 0], sizes = [16, 128], strides = [1, 1]} : vector<16x256xf32> to vector<16x128xf32>
    %3 = vector.extract_strided_slice %1 {offsets = [0, 1], sizes = [16, 128], strides = [1, 1]} : vector<16x256xf32> to vector<16x128xf32>
    %4 = vector.extract_strided_slice %1 {offsets = [0, 2], sizes = [16, 128], strides = [1, 1]} : vector<16x256xf32> to vector<16x128xf32>
    %5 = vector.extract_strided_slice %1 {offsets = [0, 3], sizes = [16, 128], strides = [1, 1]} : vector<16x256xf32> to vector<16x128xf32>
    %6 = tpu.concatenate %2, %3, %4, %5 in 0 : vector<16x128xf32>, vector<16x128xf32>, vector<16x128xf32>, vector<16x128xf32> -> vector<64x128xf32>
    %c0_3 = arith.constant 0 : index
    %c0_4 = arith.constant 0 : index
    %7 = vector.load %arg3[%c0_3, %c0_4] : memref<256x64xf32, #tpu.memory_space<vmem>>, vector<256x64xf32>
    %cst = arith.constant dense<0.000000e+00> : vector<256x128xf32>
    %8 = tpu.matmul %7, %6, %cst {dimension_numbers = #tpu.dot_dimension_numbers<[1], [0], [0], [1], [0, 0, 1, 1], [], []>} : vector<256x64xf32>, vector<64x128xf32>, vector<256x128xf32> -> vector<256x128xf32>
    %9 = vector.extract_strided_slice %8 {offsets = [0, 0], sizes = [128, 128], strides = [1, 1]} : vector<256x128xf32> to vector<128x128xf32>
    %10 = vector.extract_strided_slice %8 {offsets = [128, 0], sizes = [128, 128], strides = [1, 1]} : vector<256x128xf32> to vector<128x128xf32>
    %11 = arith.mulf %9, %9 : vector<128x128xf32>
    %12 = arith.mulf %10, %10 : vector<128x128xf32>
    %13 = arith.addf %11, %12 : vector<128x128xf32>
    %14 = math.sqrt %13 : vector<128x128xf32>
    %15 = math.log1p %14 : vector<128x128xf32>
    %c0_5 = arith.constant 0 : index
    %c0_6 = arith.constant 0 : index
    %c0_7 = arith.constant 0 : index
    %16 = vector.load %arg4[%c0_5, %c0_6, %c0_7] : memref<1x128x128xf32, #tpu.memory_space<vmem>>, vector<1x128x128xf32>
    %17 = vector.shape_cast %16 : vector<1x128x128xf32> to vector<128x128xf32>
    %18 = vector.shape_cast %15 : vector<128x128xf32> to vector<1x128x128xf32>
    tpu.vector_store %arg4[%c0_5, %c0_6, %c0_7], %18 {strides = array<i32>} : memref<1x128x128xf32, #tpu.memory_space<vmem>>, vector<1x128x128xf32>,
    return
  }
  func.func @transform_0(%arg0: i32, %arg1: i32) -> (i32, i32, i32, i32) {
    %c0_i32 = arith.constant 0 : i32
    %c0_i32_0 = arith.constant 0 : i32
    %c0_i32_1 = arith.constant 0 : i32
    return %arg0, %arg1, %c0_i32, %c0_i32_0 : i32, i32, i32, i32
  }
  func.func @transform_1(%arg0: i32, %arg1: i32) -> (i32, i32) {
    %c0_i32 = arith.constant 0 : i32
    %c0_i32_0 = arith.constant 0 : i32
    %c0_i32_1 = arith.constant 0 : i32
    return %c0_i32, %c0_i32_0 : i32, i32
  }
  func.func @transform_2(%arg0: i32, %arg1: i32) -> (i32, i32, i32) {
    %c0_i32 = arith.constant 0 : i32
    %c0_i32_0 = arith.constant 0 : i32
    return %arg0, %c0_i32, %arg1 : i32, i32, i32
  }
}

</mosaic_0001>

<llo_original>
// kernel: lhvqt_forward.1
$region0: #{lhvqt_forward.1}
  #allocation0 [shape = 'u32[]', space=smem, size = 0x4, offset = 0x4, fixed_abs, tag = 'smem constant byte address 0x4 - core index']
  #allocation1 [shape = 'u32[144,128]{1,0:T(1,128)}', space=vmem, size = 0x12000, scoped, tag = 'internal scratch']
  %s0 = inlined_call_operand.vmem [shape: f32[2,1,16,256], index: 0, kind: input, shape index: {}]
  %s1 = inlined_call_operand.vmem [shape: f32[256,64], index: 1, kind: input, shape index: {}]
  %s2 = inlined_call_operand.hbm [shape: f32[2,128,128], index: 2, kind: output, shape index: {}]
  %s3 = sld [smem:[#allocation0]]
  $region41: #{lhvqt_forward.1} parent=0
    _
  %s5 = ssub.s32 1, %s3
  %s6 = scalar_select 0, %s5, %s3
  $region1: #{lhvqt_forward.1} parent=0
    #allocation2 [shape = 'u8[131072]{0}', space=vmem, size = 0x20000, scoped, tag = 'output window, operand 0']
    #allocation3 [shape = 's32[2]{0}', space=sflag, size = 0x8, scoped, tag = 'scoped memory for lhvqt_forward.1']
    %7 = vsyncpa [#allocation3], 0
    %s8 = scalar_lea.sflag [#allocation3], 1
    %9 = vsyncpa %s8, 0
    loop: start=0, step=1, limit=4
    $region2: #{lhvqt_forward.1} parent=1 // loop_pre_header
      _
    $region3: #{lhvqt_forward.1} parent=1 // loop_header
      %s11 = sphi 0, %s15
      %p12 = scmp.ge.s32.totalorder %s11, 4
      %s18 = sphi 0, %s30
      %s19 = sphi 0, %s26
      %s20 = sphi 0, %s18
      %s21 = sphi 0, %s19
      %s22 = sphi 0, %s20
      %s23 = sphi 0, %s21
      %s35 = sphi 0, %s37
      %s38 = sphi 0, %s35
      %s39 = sphi 0, %s38
      %s55 = sphi 0, %s39
      %s59 = sphi 0, %s59
      %s61 = sphi 0, %s59
      %s62 = sphi 0, %s61
      %s76 = sphi 0, %s62
      %s84 = sphi 0, %s86
      %s87 = sphi 0, %s84
      %s88 = sphi 0, %s87
      %s104 = sphi 0, %s88
    $region4: #{lhvqt_forward.1} parent=1 // loop_header_branch
      %14 = sbr.rel (%p12) target = $region8
    $region5: #{lhvqt_forward.1} parent=1 // loop_body
      %s16 = ssub.s32 %s11, 1
      %s17 = ssub.s32 %s11, 2
      %s24 = sadd.s32 1, %s19
      %p25 = scmp.ge.s32.totalorder %s24, 1
      %s26 = scalar_select %p25, 0, %s24
      %s27 = sadd.s32 1, %s18
      %s28 = scalar_select %p25, %s27, %s18
      %p29 = scmp.ge.s32.totalorder %s28, 2
      %s30 = scalar_select %p29, 0, %s28
      %s31 = ssub.s32 %s18, %s30
      %s32 = ssub.s32 %s19, %s26
      %s33 = sor.u32 %s31, %s32
      %p34 = scmp.eq.s32.totalorder %s33, 0
      %s36 = sadd.s32 %s35, 1
      %s37 = scalar_select %p34, %s35, %s36
      %p40 = pneg %p34
      %p41 = scmp.eq.s32.totalorder %s11, 1
      %p42 = por %p40, %p41
      %p43 = scmp.ne.s32.totalorder %s35, %s38
      %p44 = scmp.eq.s32.totalorder %s11, 0
      %p45 = por %p43, %p44
      %p46 = scmp.ne.s32.totalorder %s35, %s38
      %p47 = scmp.eq.s32.totalorder %s16, 1
      %p48 = por %p46, %p47
      %p49 = scmp.ne.s32.totalorder %s38, %s39
      %p50 = scmp.eq.s32.totalorder %s16, 0
      %p51 = por %p49, %p50
      %p52 = scmp.ne.s32.totalorder %s38, %s39
      %p53 = scmp.eq.s32.totalorder %s17, 1
      %p54 = por %p52, %p53
      %p56 = scmp.ne.s32.totalorder %s39, %s55
      %p57 = scmp.eq.s32.totalorder %s17, 0
      %p58 = por %p56, %p57
      %s60 = sadd.s32 %s59, 1
      %p63 = scmp.eq.s32.totalorder %s11, 1
      %p64 = scmp.ne.s32.totalorder %s59, %s61
      %p65 = scmp.eq.s32.totalorder %s11, 0
      %p66 = por %p64, %p65
      %p67 = scmp.ne.s32.totalorder %s59, %s61
      %p68 = scmp.eq.s32.totalorder %s16, 1
      %p69 = por %p67, %p68
      %p70 = scmp.ne.s32.totalorder %s61, %s62
      %p71 = scmp.eq.s32.totalorder %s16, 0
      %p72 = por %p70, %p71
      %p73 = scmp.ne.s32.totalorder %s61, %s62
      %p74 = scmp.eq.s32.totalorder %s17, 1
      %p75 = por %p73, %p74
      %p77 = scmp.ne.s32.totalorder %s62, %s76
      %p78 = scmp.eq.s32.totalorder %s17, 0
      %p79 = por %p77, %p78
      %s80 = ssub.s32 %s18, %s30
      %s81 = ssub.s32 %s19, %s26
      %s82 = sor.u32 %s80, %s81
      %p83 = scmp.eq.s32.totalorder %s82, 0
      %s85 = sadd.s32 %s84, 1
      %s86 = scalar_select %p83, %s84, %s85
      %p89 = pneg %p83
      %p90 = scmp.eq.s32.totalorder %s11, 1
      %p91 = por %p89, %p90
      %p92 = scmp.ne.s32.totalorder %s84, %s87
      %p93 = scmp.eq.s32.totalorder %s11, 0
      %p94 = por %p92, %p93
      %p95 = scmp.ne.s32.totalorder %s84, %s87
      %p96 = scmp.eq.s32.totalorder %s16, 1
      %p97 = por %p95, %p96
      %p98 = scmp.ne.s32.totalorder %s87, %s88
      %p99 = scmp.eq.s32.totalorder %s16, 0
      %p100 = por %p98, %p99
      %p101 = scmp.ne.s32.totalorder %s87, %s88
      %p102 = scmp.eq.s32.totalorder %s17, 1
      %p103 = por %p101, %p102
      %p105 = scmp.ne.s32.totalorder %s88, %s104
      %p106 = scmp.eq.s32.totalorder %s17, 0
      %p107 = por %p105, %p106
      %p108 = scmp.le.s32.totalorder 1, %s11
      %p109 = scmp.lt.s32.totalorder %s11, 3
      %p110 = pnand %p108, %p109
      %p111 = pneg %p110
      // Predicated region
      $region9: #{lhvqt_forward.1} parent=5 // pred_check
        _
      $region10: #{lhvqt_forward.1} parent=5 // pred_check_branch
        %113 = sbr.rel (%p110) target = $region12
      $region11: #{lhvqt_forward.1} parent=5 // pred_region
        %s114 = ssub.s32 %s11, 1
        // Predicated region
        $region13: #{lhvqt_forward.1} parent=11 // pred_check
          %p115 = pneg %p72
        $region14: #{lhvqt_forward.1} parent=11 // pred_check_branch
          %117 = sbr.rel (%p115) target = $region16
        $region15: #{lhvqt_forward.1} parent=11 // pred_region
          _
        $region16: #{lhvqt_forward.1} parent=11 // pred_fallthru
          _
      $region12: #{lhvqt_forward.1} parent=5 // pred_fallthru
        _
      %p118 = scmp.lt.s32.totalorder %s11, 2
      // Predicated region
      $region17: #{lhvqt_forward.1} parent=5 // pred_check
        %p119 = pneg %p118
      $region18: #{lhvqt_forward.1} parent=5 // pred_check_branch
        %121 = sbr.rel (%p119) target = $region20
      $region19: #{lhvqt_forward.1} parent=5 // pred_region
        // Predicated region
        $region21: #{lhvqt_forward.1} parent=19 // pred_check
          %p122 = pneg %p45
        $region22: #{lhvqt_forward.1} parent=19 // pred_check_branch
          %124 = sbr.rel (%p122) target = $region24
        $region23: #{lhvqt_forward.1} parent=19 // pred_region
          %p125 = scmp.lt.s32.totalorder %s18, 1
          %s126 = scalar_select %p125, %s18, 1
          %p127 = scmp.lt.s32.totalorder %s19, 0
          %s128 = scalar_select %p127, %s19, 0
          %s129 = smul.addr %s128, 4
          %s130 = smul.addr %s126, 4
          %s131 = sadd.s32 %s129, %s130
          %s132 = smul.addr %s131, 8
          %s133 = scalar_lea.vmem %s0, %s132
        $region24: #{lhvqt_forward.1} parent=19 // pred_fallthru
          _
      $region20: #{lhvqt_forward.1} parent=5 // pred_fallthru
        _
      %p134 = scmp.le.s32.totalorder 1, %s11
      %p135 = scmp.lt.s32.totalorder %s11, 3
      %p136 = pnand %p134, %p135
      %p137 = pneg %p136
      // Predicated region
      $region25: #{lhvqt_forward.1} parent=5 // pred_check
        _
      $region26: #{lhvqt_forward.1} parent=5 // pred_check_branch
        %139 = sbr.rel (%p136) target = $region28
      $region27: #{lhvqt_forward.1} parent=5 // pred_region
        %s140 = ssub.s32 %s11, 1
        %p141 = scmp.lt.s32.totalorder %s20, 1
        %s142 = scalar_select %p141, %s20, 1
        %p143 = scmp.lt.s32.totalorder %s21, 0
        %s144 = scalar_select %p143, %s21, 0
        %s145 = smul.addr %s144, 4
        %s146 = smul.addr %s142, 4
        %s147 = sadd.s32 %s145, %s146
        %s148 = smul.addr %s147, 8
        %s149 = scalar_lea.vmem %s0, %s148
        %p150 = pneg %p51
        %p151 = pneg %p48
        %p152 = pneg %p72
        %p153 = pneg %p69
        %p154 = pneg %p100
        %p155 = pneg %p97
        %s156 = sand.u32 %s87, 1
        %s157 = scalar_lea.sflag [#allocation3], %s156
        %s158 = sand.u32 %s87, 1
        %s159 = smul.addr %s158, 128
        %s160 = scalar_lea.vmem [#allocation2], %s159
        %p161 = scmp.lt.s32.totalorder %s20, 1
        %s162 = scalar_select %p161, %s20, 1
        %p163 = scmp.lt.s32.totalorder %s21, 0
        %s164 = scalar_select %p163, %s21, 0
        %s165 = smul.addr %s164, 4
        %s166 = smul.addr %s162, 4
        %s167 = sadd.s32 %s165, %s166
        %s168 = smul.addr %s167, 8
        %s169 = scalar_lea.vmem %s0, %s168
        %v170 = vld [vmem:[%s169] sm:$0xff]
        %v171 = vld [vmem:[%s169 + $0x8] sm:$0xff]
        %v172 = vld [vmem:[%s169 + $0x10] sm:$0xff]
        %v173 = vld [vmem:[%s169 + $0x18] sm:$0xff]
        %178 = vrot.lane.b32.xlu0 %v170, 127
        %v179 = vpop.permute.xlu0 %178
        %180 = vrot.lane.b32.xlu0 %v171, 127
        %v181 = vpop.permute.xlu0 %180
        %182 = vrot.lane.b32.xlu0 %v172, 127
        %v183 = vpop.permute.xlu0 %182
        %184 = vrot.lane.b32.xlu0 %v173, 127
        %v185 = vpop.permute.xlu0 %184
        %vm186 = vcmask 1039360
        %v187 = vsel %vm186, %v179, %v181
        %v188 = vsel %vm186, %v183, %v185
        %191 = vrot.lane.b32.xlu0 %v170, 126
        %v192 = vpop.permute.xlu0 %191
        %193 = vrot.lane.b32.xlu0 %v171, 126
        %v194 = vpop.permute.xlu0 %193
        %195 = vrot.lane.b32.xlu0 %v172, 126
        %v196 = vpop.permute.xlu0 %195
        %197 = vrot.lane.b32.xlu0 %v173, 126
        %v198 = vpop.permute.xlu0 %197
        %vm199 = vcmask 1031168
        %v200 = vsel %vm199, %v192, %v194
        %v201 = vsel %vm199, %v196, %v198
        %204 = vrot.lane.b32.xlu0 %v170, 125
        %v205 = vpop.permute.xlu0 %204
        %206 = vrot.lane.b32.xlu0 %v171, 125
        %v207 = vpop.permute.xlu0 %206
        %208 = vrot.lane.b32.xlu0 %v172, 125
        %v209 = vpop.permute.xlu0 %208
        %210 = vrot.lane.b32.xlu0 %v173, 125
        %v211 = vpop.permute.xlu0 %210
        %vm212 = vcmask 1022976
        %v213 = vsel %vm212, %v205, %v207
        %v214 = vsel %vm212, %v209, %v211
        %v217 = vld [vmem:[%s1] sm:$0xff]
        %v218 = vld [vmem:[%s1 + $0x8] sm:$0xff]
        %v219 = vld [vmem:[%s1 + $0x10] sm:$0xff]
        %v220 = vld [vmem:[%s1 + $0x18] sm:$0xff]
        %v221 = vld [vmem:[%s1 + $0x20] sm:$0xff]
        %v222 = vld [vmem:[%s1 + $0x28] sm:$0xff]
        %v223 = vld [vmem:[%s1 + $0x30] sm:$0xff]
        %v224 = vld [vmem:[%s1 + $0x38] sm:$0xff]
        %v225 = vld [vmem:[%s1 + $0x40] sm:$0xff]
        %v226 = vld [vmem:[%s1 + $0x48] sm:$0xff]
        %v227 = vld [vmem:[%s1 + $0x50] sm:$0xff]
        %v228 = vld [vmem:[%s1 + $0x58] sm:$0xff]
        %v229 = vld [vmem:[%s1 + $0x60] sm:$0xff]
        %v230 = vld [vmem:[%s1 + $0x68] sm:$0xff]
        %v231 = vld [vmem:[%s1 + $0x70] sm:$0xff]
        %v232 = vld [vmem:[%s1 + $0x78] sm:$0xff]
        %v233 = vld [vmem:[%s1 + $0x80] sm:$0xff]
        %v234 = vld [vmem:[%s1 + $0x88] sm:$0xff]
        %v235 = vld [vmem:[%s1 + $0x90] sm:$0xff]
        %v236 = vld [vmem:[%s1 + $0x98] sm:$0xff]
        %v237 = vld [vmem:[%s1 + $0xa0] sm:$0xff]
        %v238 = vld [vmem:[%s1 + $0xa8] sm:$0xff]
        %v239 = vld [vmem:[%s1 + $0xb0] sm:$0xff]
        %v240 = vld [vmem:[%s1 + $0xb8] sm:$0xff]
        %v241 = vld [vmem:[%s1 + $0xc0] sm:$0xff]
        %v242 = vld [vmem:[%s1 + $0xc8] sm:$0xff]
        %v243 = vld [vmem:[%s1 + $0xd0] sm:$0xff]
        %v244 = vld [vmem:[%s1 + $0xd8] sm:$0xff]
        %v245 = vld [vmem:[%s1 + $0xe0] sm:$0xff]
        %v246 = vld [vmem:[%s1 + $0xe8] sm:$0xff]
        %v247 = vld [vmem:[%s1 + $0xf0] sm:$0xff]
        %v248 = vld [vmem:[%s1 + $0xf8] sm:$0xff]
        %vm249 = vcmask 523264
        %v251 = vsel %vm249, %v217, 0
        %v254 = vsel %vm249, %v218, 0
        %v257 = vsel %vm249, %v219, 0
        %v260 = vsel %vm249, %v220, 0
        %v263 = vsel %vm249, %v221, 0
        %v266 = vsel %vm249, %v222, 0
        %v269 = vsel %vm249, %v223, 0
        %v272 = vsel %vm249, %v224, 0
        %v275 = vsel %vm249, %v225, 0
        %v278 = vsel %vm249, %v226, 0
        %v281 = vsel %vm249, %v227, 0
        %v284 = vsel %vm249, %v228, 0
        %v287 = vsel %vm249, %v229, 0
        %v290 = vsel %vm249, %v230, 0
        %v293 = vsel %vm249, %v231, 0
        %v296 = vsel %vm249, %v232, 0
        %v299 = vsel %vm249, %v233, 0
        %v302 = vsel %vm249, %v234, 0
        %v305 = vsel %vm249, %v235, 0
        %v308 = vsel %vm249, %v236, 0
        %v311 = vsel %vm249, %v237, 0
        %v314 = vsel %vm249, %v238, 0
        %v317 = vsel %vm249, %v239, 0
        %v320 = vsel %vm249, %v240, 0
        %v323 = vsel %vm249, %v241, 0
        %v326 = vsel %vm249, %v242, 0
        %v329 = vsel %vm249, %v243, 0
        %v332 = vsel %vm249, %v244, 0
        %v335 = vsel %vm249, %v245, 0
        %v338 = vsel %vm249, %v246, 0
        %v341 = vsel %vm249, %v247, 0
        %v344 = vsel %vm249, %v248, 0
        %346 = vmatprep.subr.mxu0 0.0
        %347 = vmatpush1.msra.mxu0 0.0
        %348 = vmatprep.subr.mxu0 0.0
        %349 = vmatpush1.msra.mxu0 0.0
        %350 = vmatprep.subr.mxu0 0.0
        %351 = vmatpush1.msra.mxu0 0.0
        %352 = vmatprep.subr.mxu0 0.0
        %353 = vmatpush1.msra.mxu0 0.0
        %354 = vmatprep.subr.mxu0 0.0
        %355 = vmatpush1.msra.mxu0 0.0
        %356 = vmatprep.subr.mxu0 0.0
        %357 = vmatpush1.msra.mxu0 0.0
        %358 = vmatprep.subr.mxu0 0.0
        %359 = vmatpush1.msra.mxu0 0.0
        %360 = vmatprep.subr.mxu0 0.0
        %361 = vmatpush1.msra.mxu0 0.0
        %362 = vmatprep.subr.mxu0 0.0
        %363 = vmatpush1.msra.mxu0 %v214
        %364 = vmatprep.subr.mxu0 0.0
        %365 = vmatpush1.msra.mxu0 %v213
        %366 = vmatprep.subr.mxu0 0.0
        %367 = vmatpush1.msra.mxu0 %v201
        %368 = vmatprep.subr.mxu0 0.0
        %369 = vmatpush1.msra.mxu0 %v200
        %370 = vmatprep.subr.mxu0 0.0
        %371 = vmatpush1.msra.mxu0 %v188
        %372 = vmatprep.subr.mxu0 0.0
        %373 = vmatpush1.msra.mxu0 %v187
        %374 = vmatprep.subr.mxu0 0.0
        %375 = vmatpush1.msra.mxu0 %v172
        %376 = vmatprep.subr.mxu0 0.0
        %377 = vmatpush1.msra.mxu0 %v170
        %378 = vmatprep.subr.mxu0 0.0
        %379 = vmatpush2.msra.mxu0 0.0
        %380 = vmatprep.subr.mxu0 0.0
        %381 = vmatpush2.msra.mxu0 0.0
        %382 = vmatprep.subr.mxu0 0.0
        %383 = vmatpush2.msra.mxu0 0.0
        %384 = vmatprep.subr.mxu0 0.0
        %385 = vmatpush2.msra.mxu0 0.0
        %386 = vmatprep.subr.mxu0 0.0
        %387 = vmatpush2.msra.mxu0 0.0
        %388 = vmatprep.subr.mxu0 0.0
        %389 = vmatpush2.msra.mxu0 0.0
        %390 = vmatprep.subr.mxu0 0.0
        %391 = vmatpush2.msra.mxu0 0.0
        %392 = vmatprep.subr.mxu0 0.0
        %393 = vmatpush2.msra.mxu0 0.0
        %394 = vmatprep.subr.mxu0 0.0
        %395 = vmatpush2.msra.mxu0 0.0
        %396 = vmatprep.subr.mxu0 0.0
        %397 = vmatpush2.msra.mxu0 0.0
        %398 = vmatprep.subr.mxu0 0.0
        %399 = vmatpush2.msra.mxu0 0.0
        %400 = vmatprep.subr.mxu0 0.0
        %401 = vmatpush2.msra.mxu0 0.0
        %402 = vmatprep.subr.mxu0 0.0
        %403 = vmatpush2.msra.mxu0 0.0
        %404 = vmatprep.subr.mxu0 0.0
        %405 = vmatpush2.msra.mxu0 0.0
        %406 = vmatprep.subr.mxu0 0.0
        %407 = vmatpush2.msra.mxu0 0.0
        %408 = vmatprep.subr.mxu0 0.0
        %409 = vmatpush2.msra.mxu0 0.0
        %410 = vmatprep.mubr.f32.mxu0 0.0
        %411 = vmatmul.mubr.f32.gmra.mxu0 %v251
        %v412 = vpop.f32.mrf.mxu0
        %v413 = vadd.f32 0.0, %v412
        %v414 = vpop.f32.mrf.mxu0
        %415 = vmatprep.mubr.f32.mxu0 0.0
        %416 = vmatmul.mubr.f32.gmra.mxu0 %v254
        %v417 = vpop.f32.mrf.mxu0
        %v418 = vadd.f32 0.0, %v417
        %v419 = vpop.f32.mrf.mxu0
        %420 = vmatprep.mubr.f32.mxu0 0.0
        %421 = vmatmul.mubr.f32.gmra.mxu0 %v257
        %v422 = vpop.f32.mrf.mxu0
        %v423 = vadd.f32 0.0, %v422
        %v424 = vpop.f32.mrf.mxu0
        %425 = vmatprep.mubr.f32.mxu0 0.0
        %426 = vmatmul.mubr.f32.gmra.mxu0 %v260
        %v427 = vpop.f32.mrf.mxu0
        %v428 = vadd.f32 0.0, %v427
        %v429 = vpop.f32.mrf.mxu0
        %430 = vmatprep.mubr.f32.mxu0 0.0
        %431 = vmatmul.mubr.f32.gmra.mxu0 %v263
        %v432 = vpop.f32.mrf.mxu0
        %v433 = vadd.f32 0.0, %v432
        %v434 = vpop.f32.mrf.mxu0
        %435 = vmatprep.mubr.f32.mxu0 0.0
        %436 = vmatmul.mubr.f32.gmra.mxu0 %v266
        %v437 = vpop.f32.mrf.mxu0
        %v438 = vadd.f32 0.0, %v437
        %v439 = vpop.f32.mrf.mxu0
        %440 = vmatprep.mubr.f32.mxu0 0.0
        %441 = vmatmul.mubr.f32.gmra.mxu0 %v269
        %v442 = vpop.f32.mrf.mxu0
        %v443 = vadd.f32 0.0, %v442
        %v444 = vpop.f32.mrf.mxu0
        %445 = vmatprep.mubr.f32.mxu0 0.0
        %446 = vmatmul.mubr.f32.gmra.mxu0 %v272
        %v447 = vpop.f32.mrf.mxu0
        %v448 = vadd.f32 0.0, %v447
        %v449 = vpop.f32.mrf.mxu0
        %450 = vmatprep.mubr.f32.mxu0 0.0
        %451 = vmatmul.mubr.f32.gmra.mxu0 %v275
        %v452 = vpop.f32.mrf.mxu0
        %v453 = vadd.f32 0.0, %v452
        %v454 = vpop.f32.mrf.mxu0
        %455 = vmatprep.mubr.f32.mxu0 0.0
        %456 = vmatmul.mubr.f32.gmra.mxu0 %v278
        %v457 = vpop.f32.mrf.mxu0
        %v458 = vadd.f32 0.0, %v457
        %v459 = vpop.f32.mrf.mxu0
        %460 = vmatprep.mubr.f32.mxu0 0.0
        %461 = vmatmul.mubr.f32.gmra.mxu0 %v281
        %v462 = vpop.f32.mrf.mxu0
        %v463 = vadd.f32 0.0, %v462
        %v464 = vpop.f32.mrf.mxu0
        %465 = vmatprep.mubr.f32.mxu0 0.0
        %466 = vmatmul.mubr.f32.gmra.mxu0 %v284
        %v467 = vpop.f32.mrf.mxu0
        %v468 = vadd.f32 0.0, %v467
        %v469 = vpop.f32.mrf.mxu0
        %470 = vmatprep.mubr.f32.mxu0 0.0
        %471 = vmatmul.mubr.f32.gmra.mxu0 %v287
        %v472 = vpop.f32.mrf.mxu0
        %v473 = vadd.f32 0.0, %v472
        %v474 = vpop.f32.mrf.mxu0
        %475 = vmatprep.mubr.f32.mxu0 0.0
        %476 = vmatmul.mubr.f32.gmra.mxu0 %v290
        %v477 = vpop.f32.mrf.mxu0
        %v478 = vadd.f32 0.0, %v477
        %v479 = vpop.f32.mrf.mxu0
        %480 = vmatprep.mubr.f32.mxu0 0.0
        %481 = vmatmul.mubr.f32.gmra.mxu0 %v293
        %v482 = vpop.f32.mrf.mxu0
        %v483 = vadd.f32 0.0, %v482
        %v484 = vpop.f32.mrf.mxu0
        %485 = vmatprep.mubr.f32.mxu0 0.0
        %486 = vmatmul.mubr.f32.gmra.mxu0 %v296
        %v487 = vpop.f32.mrf.mxu0
        %v488 = vadd.f32 0.0, %v487
        %v489 = vpop.f32.mrf.mxu0
        %490 = vmatprep.mubr.f32.mxu0 0.0
        %491 = vmatmul.mubr.f32.gmra.mxu0 %v299
        %v492 = vpop.f32.mrf.mxu0
        %v493 = vadd.f32 0.0, %v492
        %v494 = vpop.f32.mrf.mxu0
        %495 = vmatprep.mubr.f32.mxu0 0.0
        %496 = vmatmul.mubr.f32.gmra.mxu0 %v302
        %v497 = vpop.f32.mrf.mxu0
        %v498 = vadd.f32 0.0, %v497
        %v499 = vpop.f32.mrf.mxu0
        %500 = vmatprep.mubr.f32.mxu0 0.0
        %501 = vmatmul.mubr.f32.gmra.mxu0 %v305
        %v502 = vpop.f32.mrf.mxu0
        %v503 = vadd.f32 0.0, %v502
        %v504 = vpop.f32.mrf.mxu0
        %505 = vmatprep.mubr.f32.mxu0 0.0
        %506 = vmatmul.mubr.f32.gmra.mxu0 %v308
        %v507 = vpop.f32.mrf.mxu0
        %v508 = vadd.f32 0.0, %v507
        %v509 = vpop.f32.mrf.mxu0
        %510 = vmatprep.mubr.f32.mxu0 0.0
        %511 = vmatmul.mubr.f32.gmra.mxu0 %v311
        %v512 = vpop.f32.mrf.mxu0
        %v513 = vadd.f32 0.0, %v512
        %v514 = vpop.f32.mrf.mxu0
        %515 = vmatprep.mubr.f32.mxu0 0.0
        %516 = vmatmul.mubr.f32.gmra.mxu0 %v314
        %v517 = vpop.f32.mrf.mxu0
        %v518 = vadd.f32 0.0, %v517
        %v519 = vpop.f32.mrf.mxu0
        %520 = vmatprep.mubr.f32.mxu0 0.0
        %521 = vmatmul.mubr.f32.gmra.mxu0 %v317
        %v522 = vpop.f32.mrf.mxu0
        %v523 = vadd.f32 0.0, %v522
        %v524 = vpop.f32.mrf.mxu0
        %525 = vmatprep.mubr.f32.mxu0 0.0
        %526 = vmatmul.mubr.f32.gmra.mxu0 %v320
        %v527 = vpop.f32.mrf.mxu0
        %v528 = vadd.f32 0.0, %v527
        %v529 = vpop.f32.mrf.mxu0
        %530 = vmatprep.mubr.f32.mxu0 0.0
        %531 = vmatmul.mubr.f32.gmra.mxu0 %v323
        %v532 = vpop.f32.mrf.mxu0
        %v533 = vadd.f32 0.0, %v532
        %v534 = vpop.f32.mrf.mxu0
        %535 = vmatprep.mubr.f32.mxu0 0.0
        %536 = vmatmul.mubr.f32.gmra.mxu0 %v326
        %v537 = vpop.f32.mrf.mxu0
        %v538 = vadd.f32 0.0, %v537
        %v539 = vpop.f32.mrf.mxu0
        %540 = vmatprep.mubr.f32.mxu0 0.0
        %541 = vmatmul.mubr.f32.gmra.mxu0 %v329
        %v542 = vpop.f32.mrf.mxu0
        %v543 = vadd.f32 0.0, %v542
        %v544 = vpop.f32.mrf.mxu0
        %545 = vmatprep.mubr.f32.mxu0 0.0
        %546 = vmatmul.mubr.f32.gmra.mxu0 %v332
        %v547 = vpop.f32.mrf.mxu0
        %v548 = vadd.f32 0.0, %v547
        %v549 = vpop.f32.mrf.mxu0
        %550 = vmatprep.mubr.f32.mxu0 0.0
        %551 = vmatmul.mubr.f32.gmra.mxu0 %v335
        %v552 = vpop.f32.mrf.mxu0
        %v553 = vadd.f32 0.0, %v552
        %v554 = vpop.f32.mrf.mxu0
        %555 = vmatprep.mubr.f32.mxu0 0.0
        %556 = vmatmul.mubr.f32.gmra.mxu0 %v338
        %v557 = vpop.f32.mrf.mxu0
        %v558 = vadd.f32 0.0, %v557
        %v559 = vpop.f32.mrf.mxu0
        %560 = vmatprep.mubr.f32.mxu0 0.0
        %561 = vmatmul.mubr.f32.gmra.mxu0 %v341
        %v562 = vpop.f32.mrf.mxu0
        %v563 = vadd.f32 0.0, %v562
        %v564 = vpop.f32.mrf.mxu0
        %565 = vmatprep.mubr.f32.mxu0 0.0
        %566 = vmatmul.mubr.f32.gmra.mxu0 %v344
        %v567 = vpop.f32.mrf.mxu0
        %v568 = vadd.f32 0.0, %v567
        %v569 = vpop.f32.mrf.mxu0
        %570 = vdwg.mxu0
        %v571 = vmul.f32 %v413, %v413
        %v572 = vmul.f32 %v418, %v418
        %v573 = vmul.f32 %v423, %v423
        %v574 = vmul.f32 %v428, %v428
        %v575 = vmul.f32 %v433, %v433
        %v576 = vmul.f32 %v438, %v438
        %v577 = vmul.f32 %v443, %v443
        %v578 = vmul.f32 %v448, %v448
        %v579 = vmul.f32 %v453, %v453
        %v580 = vmul.f32 %v458, %v458
        %v581 = vmul.f32 %v463, %v463
        %v582 = vmul.f32 %v468, %v468
        %v583 = vmul.f32 %v473, %v473
        %v584 = vmul.f32 %v478, %v478
        %v585 = vmul.f32 %v483, %v483
        %v586 = vmul.f32 %v488, %v488
        %v587 = vmul.f32 %v493, %v493
        %v588 = vmul.f32 %v498, %v498
        %v589 = vmul.f32 %v503, %v503
        %v590 = vmul.f32 %v508, %v508
        %v591 = vmul.f32 %v513, %v513
        %v592 = vmul.f32 %v518, %v518
        %v593 = vmul.f32 %v523, %v523
        %v594 = vmul.f32 %v528, %v528
        %v595 = vmul.f32 %v533, %v533
        %v596 = vmul.f32 %v538, %v538
        %v597 = vmul.f32 %v543, %v543
        %v598 = vmul.f32 %v548, %v548
        %v599 = vmul.f32 %v553, %v553
        %v600 = vmul.f32 %v558, %v558
        %v601 = vmul.f32 %v563, %v563
        %v602 = vmul.f32 %v568, %v568
        %v603 = vadd.f32 %v571, %v587
        %v604 = vadd.f32 %v572, %v588
        %v605 = vadd.f32 %v573, %v589
        %v606 = vadd.f32 %v574, %v590
        %v607 = vadd.f32 %v575, %v591
        %v608 = vadd.f32 %v576, %v592
        %v609 = vadd.f32 %v577, %v593
        %v610 = vadd.f32 %v578, %v594
        %v611 = vadd.f32 %v579, %v595
        %v612 = vadd.f32 %v580, %v596
        %v613 = vadd.f32 %v581, %v597
        %v614 = vadd.f32 %v582, %v598
        %v615 = vadd.f32 %v583, %v599
        %v616 = vadd.f32 %v584, %v600
        %v617 = vadd.f32 %v585, %v601
        %v618 = vadd.f32 %v586, %v602
        %v619 = vrsqrt.pop %v603
        %v620 = vmul.f32 %v603, %v619
        %vm621 = vcmp.eq.f32.partialorder %v603, inf
        %v622 = vsel %vm621, %v603, %v620
        %vm623 = vcmp.eq.f32.partialorder %v603, 0.0
        %v624 = vand.u32 %v603, 2147483648
        %v625 = vsel %vm623, %v624, %v622
        %v626 = vrsqrt.pop %v604
        %v627 = vmul.f32 %v604, %v626
        %vm628 = vcmp.eq.f32.partialorder %v604, inf
        %v629 = vsel %vm628, %v604, %v627
        %vm630 = vcmp.eq.f32.partialorder %v604, 0.0
        %v631 = vand.u32 %v604, 2147483648
        %v632 = vsel %vm630, %v631, %v629
        %v633 = vrsqrt.pop %v605
        %v634 = vmul.f32 %v605, %v633
        %vm635 = vcmp.eq.f32.partialorder %v605, inf
        %v636 = vsel %vm635, %v605, %v634
        %vm637 = vcmp.eq.f32.partialorder %v605, 0.0
        %v638 = vand.u32 %v605, 2147483648
        %v639 = vsel %vm637, %v638, %v636
        %v640 = vrsqrt.pop %v606
        %v641 = vmul.f32 %v606, %v640
        %vm642 = vcmp.eq.f32.partialorder %v606, inf
        %v643 = vsel %vm642, %v606, %v641
        %vm644 = vcmp.eq.f32.partialorder %v606, 0.0
        %v645 = vand.u32 %v606, 2147483648
        %v646 = vsel %vm644, %v645, %v643
        %v647 = vrsqrt.pop %v607
        %v648 = vmul.f32 %v607, %v647
        %vm649 = vcmp.eq.f32.partialorder %v607, inf
        %v650 = vsel %vm649, %v607, %v648
        %vm651 = vcmp.eq.f32.partialorder %v607, 0.0
        %v652 = vand.u32 %v607, 2147483648
        %v653 = vsel %vm651, %v652, %v650
        %v654 = vrsqrt.pop %v608
        %v655 = vmul.f32 %v608, %v654
        %vm656 = vcmp.eq.f32.partialorder %v608, inf
        %v657 = vsel %vm656, %v608, %v655
        %vm658 = vcmp.eq.f32.partialorder %v608, 0.0
        %v659 = vand.u32 %v608, 2147483648
        %v660 = vsel %vm658, %v659, %v657
        %v661 = vrsqrt.pop %v609
        %v662 = vmul.f32 %v609, %v661
        %vm663 = vcmp.eq.f32.partialorder %v609, inf
        %v664 = vsel %vm663, %v609, %v662
        %vm665 = vcmp.eq.f32.partialorder %v609, 0.0
        %v666 = vand.u32 %v609, 2147483648
        %v667 = vsel %vm665, %v666, %v664
        %v668 = vrsqrt.pop %v610
        %v669 = vmul.f32 %v610, %v668
        %vm670 = vcmp.eq.f32.partialorder %v610, inf
        %v671 = vsel %vm670, %v610, %v669
        %vm672 = vcmp.eq.f32.partialorder %v610, 0.0
        %v673 = vand.u32 %v610, 2147483648
        %v674 = vsel %vm672, %v673, %v671
        %v675 = vrsqrt.pop %v611
        %v676 = vmul.f32 %v611, %v675
        %vm677 = vcmp.eq.f32.partialorder %v611, inf
        %v678 = vsel %vm677, %v611, %v676
        %vm679 = vcmp.eq.f32.partialorder %v611, 0.0
        %v680 = vand.u32 %v611, 2147483648
        %v681 = vsel %vm679, %v680, %v678
        %v682 = vrsqrt.pop %v612
        %v683 = vmul.f32 %v612, %v682
        %vm684 = vcmp.eq.f32.partialorder %v612, inf
        %v685 = vsel %vm684, %v612, %v683
        %vm686 = vcmp.eq.f32.partialorder %v612, 0.0
        %v687 = vand.u32 %v612, 2147483648
        %v688 = vsel %vm686, %v687, %v685
        %v689 = vrsqrt.pop %v613
        %v690 = vmul.f32 %v613, %v689
        %vm691 = vcmp.eq.f32.partialorder %v613, inf
        %v692 = vsel %vm691, %v613, %v690
        %vm693 = vcmp.eq.f32.partialorder %v613, 0.0
        %v694 = vand.u32 %v613, 2147483648
        %v695 = vsel %vm693, %v694, %v692
        %v696 = vrsqrt.pop %v614
        %v697 = vmul.f32 %v614, %v696
        %vm698 = vcmp.eq.f32.partialorder %v614, inf
        %v699 = vsel %vm698, %v614, %v697
        %vm700 = vcmp.eq.f32.partialorder %v614, 0.0
        %v701 = vand.u32 %v614, 2147483648
        %v702 = vsel %vm700, %v701, %v699
        %v703 = vrsqrt.pop %v615
        %v704 = vmul.f32 %v615, %v703
        %vm705 = vcmp.eq.f32.partialorder %v615, inf
        %v706 = vsel %vm705, %v615, %v704
        %vm707 = vcmp.eq.f32.partialorder %v615, 0.0
        %v708 = vand.u32 %v615, 2147483648
        %v709 = vsel %vm707, %v708, %v706
        %v710 = vrsqrt.pop %v616
        %v711 = vmul.f32 %v616, %v710
        %vm712 = vcmp.eq.f32.partialorder %v616, inf
        %v713 = vsel %vm712, %v616, %v711
        %vm714 = vcmp.eq.f32.partialorder %v616, 0.0
        %v715 = vand.u32 %v616, 2147483648
        %v716 = vsel %vm714, %v715, %v713
        %v717 = vrsqrt.pop %v617
        %v718 = vmul.f32 %v617, %v717
        %vm719 = vcmp.eq.f32.partialorder %v617, inf
        %v720 = vsel %vm719, %v617, %v718
        %vm721 = vcmp.eq.f32.partialorder %v617, 0.0
        %v722 = vand.u32 %v617, 2147483648
        %v723 = vsel %vm721, %v722, %v720
        %v724 = vrsqrt.pop %v618
        %v725 = vmul.f32 %v618, %v724
        %vm726 = vcmp.eq.f32.partialorder %v618, inf
        %v727 = vsel %vm726, %v618, %v725
        %vm728 = vcmp.eq.f32.partialorder %v618, 0.0
        %v729 = vand.u32 %v618, 2147483648
        %v730 = vsel %vm728, %v729, %v727
        %v731 = vadd.f32 %v625, 1.0
        %v732 = vlog2.pop %v731
        %v733 = vmul.f32 %v732, 0.6931472
        %v734 = vmul.f32 -0.5, %v625
        %v735 = vadd.f32 %v734, 1.0
        %v736 = vmul.f32 %v735, %v625
        %v737 = vand.u32 2147483647, %v625
        %vm738 = vcmp.lt.f32.partialorder %v737, 0.0004427343
        %v739 = vsel %vm738, %v736, %v733
        %v740 = vadd.f32 %v632, 1.0
        %v741 = vlog2.pop %v740
        %v742 = vmul.f32 %v741, 0.6931472
        %v743 = vmul.f32 -0.5, %v632
        %v744 = vadd.f32 %v743, 1.0
        %v745 = vmul.f32 %v744, %v632
        %v746 = vand.u32 2147483647, %v632
        %vm747 = vcmp.lt.f32.partialorder %v746, 0.0004427343
        %v748 = vsel %vm747, %v745, %v742
        %v749 = vadd.f32 %v639, 1.0
        %v750 = vlog2.pop %v749
        %v751 = vmul.f32 %v750, 0.6931472
        %v752 = vmul.f32 -0.5, %v639
        %v753 = vadd.f32 %v752, 1.0
        %v754 = vmul.f32 %v753, %v639
        %v755 = vand.u32 2147483647, %v639
        %vm756 = vcmp.lt.f32.partialorder %v755, 0.0004427343
        %v757 = vsel %vm756, %v754, %v751
        %v758 = vadd.f32 %v646, 1.0
        %v759 = vlog2.pop %v758
        %v760 = vmul.f32 %v759, 0.6931472
        %v761 = vmul.f32 -0.5, %v646
        %v762 = vadd.f32 %v761, 1.0
        %v763 = vmul.f32 %v762, %v646
        %v764 = vand.u32 2147483647, %v646
        %vm765 = vcmp.lt.f32.partialorder %v764, 0.0004427343
        %v766 = vsel %vm765, %v763, %v760
        %v767 = vadd.f32 %v653, 1.0
        %v768 = vlog2.pop %v767
        %v769 = vmul.f32 %v768, 0.6931472
        %v770 = vmul.f32 -0.5, %v653
        %v771 = vadd.f32 %v770, 1.0
        %v772 = vmul.f32 %v771, %v653
        %v773 = vand.u32 2147483647, %v653
        %vm774 = vcmp.lt.f32.partialorder %v773, 0.0004427343
        %v775 = vsel %vm774, %v772, %v769
        %v776 = vadd.f32 %v660, 1.0
        %v777 = vlog2.pop %v776
        %v778 = vmul.f32 %v777, 0.6931472
        %v779 = vmul.f32 -0.5, %v660
        %v780 = vadd.f32 %v779, 1.0
        %v781 = vmul.f32 %v780, %v660
        %v782 = vand.u32 2147483647, %v660
        %vm783 = vcmp.lt.f32.partialorder %v782, 0.0004427343
        %v784 = vsel %vm783, %v781, %v778
        %v785 = vadd.f32 %v667, 1.0
        %v786 = vlog2.pop %v785
        %v787 = vmul.f32 %v786, 0.6931472
        %v788 = vmul.f32 -0.5, %v667
        %v789 = vadd.f32 %v788, 1.0
        %v790 = vmul.f32 %v789, %v667
        %v791 = vand.u32 2147483647, %v667
        %vm792 = vcmp.lt.f32.partialorder %v791, 0.0004427343
        %v793 = vsel %vm792, %v790, %v787
        %v794 = vadd.f32 %v674, 1.0
        %v795 = vlog2.pop %v794
        %v796 = vmul.f32 %v795, 0.6931472
        %v797 = vmul.f32 -0.5, %v674
        %v798 = vadd.f32 %v797, 1.0
        %v799 = vmul.f32 %v798, %v674
        %v800 = vand.u32 2147483647, %v674
        %vm801 = vcmp.lt.f32.partialorder %v800, 0.0004427343
        %v802 = vsel %vm801, %v799, %v796
        %v803 = vadd.f32 %v681, 1.0
        %v804 = vlog2.pop %v803
        %v805 = vmul.f32 %v804, 0.6931472
        %v806 = vmul.f32 -0.5, %v681
        %v807 = vadd.f32 %v806, 1.0
        %v808 = vmul.f32 %v807, %v681
        %v809 = vand.u32 2147483647, %v681
        %vm810 = vcmp.lt.f32.partialorder %v809, 0.0004427343
        %v811 = vsel %vm810, %v808, %v805
        %v812 = vadd.f32 %v688, 1.0
        %v813 = vlog2.pop %v812
        %v814 = vmul.f32 %v813, 0.6931472
        %v815 = vmul.f32 -0.5, %v688
        %v816 = vadd.f32 %v815, 1.0
        %v817 = vmul.f32 %v816, %v688
        %v818 = vand.u32 2147483647, %v688
        %vm819 = vcmp.lt.f32.partialorder %v818, 0.0004427343
        %v820 = vsel %vm819, %v817, %v814
        %v821 = vadd.f32 %v695, 1.0
        %v822 = vlog2.pop %v821
        %v823 = vmul.f32 %v822, 0.6931472
        %v824 = vmul.f32 -0.5, %v695
        %v825 = vadd.f32 %v824, 1.0
        %v826 = vmul.f32 %v825, %v695
        %v827 = vand.u32 2147483647, %v695
        %vm828 = vcmp.lt.f32.partialorder %v827, 0.0004427343
        %v829 = vsel %vm828, %v826, %v823
        %v830 = vadd.f32 %v702, 1.0
        %v831 = vlog2.pop %v830
        %v832 = vmul.f32 %v831, 0.6931472
        %v833 = vmul.f32 -0.5, %v702
        %v834 = vadd.f32 %v833, 1.0
        %v835 = vmul.f32 %v834, %v702
        %v836 = vand.u32 2147483647, %v702
        %vm837 = vcmp.lt.f32.partialorder %v836, 0.0004427343
        %v838 = vsel %vm837, %v835, %v832
        %v839 = vadd.f32 %v709, 1.0
        %v840 = vlog2.pop %v839
        %v841 = vmul.f32 %v840, 0.6931472
        %v842 = vmul.f32 -0.5, %v709
        %v843 = vadd.f32 %v842, 1.0
        %v844 = vmul.f32 %v843, %v709
        %v845 = vand.u32 2147483647, %v709
        %vm846 = vcmp.lt.f32.partialorder %v845, 0.0004427343
        %v847 = vsel %vm846, %v844, %v841
        %v848 = vadd.f32 %v716, 1.0
        %v849 = vlog2.pop %v848
        %v850 = vmul.f32 %v849, 0.6931472
        %v851 = vmul.f32 -0.5, %v716
        %v852 = vadd.f32 %v851, 1.0
        %v853 = vmul.f32 %v852, %v716
        %v854 = vand.u32 2147483647, %v716
        %vm855 = vcmp.lt.f32.partialorder %v854, 0.0004427343
        %v856 = vsel %vm855, %v853, %v850
        %v857 = vadd.f32 %v723, 1.0
        %v858 = vlog2.pop %v857
        %v859 = vmul.f32 %v858, 0.6931472
        %v860 = vmul.f32 -0.5, %v723
        %v861 = vadd.f32 %v860, 1.0
        %v862 = vmul.f32 %v861, %v723
        %v863 = vand.u32 2147483647, %v723
        %vm864 = vcmp.lt.f32.partialorder %v863, 0.0004427343
        %v865 = vsel %vm864, %v862, %v859
        %v866 = vadd.f32 %v730, 1.0
        %v867 = vlog2.pop %v866
        %v868 = vmul.f32 %v867, 0.6931472
        %v869 = vmul.f32 -0.5, %v730
        %v870 = vadd.f32 %v869, 1.0
        %v871 = vmul.f32 %v870, %v730
        %v872 = vand.u32 2147483647, %v730
        %vm873 = vcmp.lt.f32.partialorder %v872, 0.0004427343
        %v874 = vsel %vm873, %v871, %v868
        %875 = vst [vmem:[%s160] sm:$0xff] %v739
        %876 = vst [vmem:[%s160 + $0x8] sm:$0xff] %v748
        %877 = vst [vmem:[%s160 + $0x10] sm:$0xff] %v757
        %878 = vst [vmem:[%s160 + $0x18] sm:$0xff] %v766
        %879 = vst [vmem:[%s160 + $0x20] sm:$0xff] %v775
        %880 = vst [vmem:[%s160 + $0x28] sm:$0xff] %v784
        %881 = vst [vmem:[%s160 + $0x30] sm:$0xff] %v793
        %882 = vst [vmem:[%s160 + $0x38] sm:$0xff] %v802
        %883 = vst [vmem:[%s160 + $0x40] sm:$0xff] %v811
        %884 = vst [vmem:[%s160 + $0x48] sm:$0xff] %v820
        %885 = vst [vmem:[%s160 + $0x50] sm:$0xff] %v829
        %886 = vst [vmem:[%s160 + $0x58] sm:$0xff] %v838
        %887 = vst [vmem:[%s160 + $0x60] sm:$0xff] %v847
        %888 = vst [vmem:[%s160 + $0x68] sm:$0xff] %v856
        %889 = vst [vmem:[%s160 + $0x70] sm:$0xff] %v865
        %890 = vst [vmem:[%s160 + $0x78] sm:$0xff] %v874
        %s891 = sand.u32 %s87, 1
        %s892 = scalar_lea.sflag [#allocation3], %s891
        %s893 = sand.u32 %s87, 1
        %s894 = smul.addr %s893, 128
        %s895 = scalar_lea.vmem [#allocation2], %s894
        // Predicated region
        $region29: #{lhvqt_forward.1} parent=27 // pred_check
          %p896 = pneg %p97
        $region30: #{lhvqt_forward.1} parent=27 // pred_check_branch
          %898 = sbr.rel (%p896) target = $region32
        $region31: #{lhvqt_forward.1} parent=27 // pred_region
          %s900 = ssub.s32 2048, 2048
          %901 = vsyncadd %s892, %s900
          %s902 = smul.addr %s20, 16
          %s903 = sadd.s32 %s21, %s902
          %s904 = smul.addr %s903, 128
          %s905 = scalar_lea.hbm %s2, %s904
          %s906 = sshll.u32 %s895, 4
          %s907 = int_to_ptr.vmem [resolvable:$true] %s906
          %912 = dma.vmem_to_hbm [thread:$0]  %s907, 2048, %s905, %s892, 128, 128, 8
        $region32: #{lhvqt_forward.1} parent=27 // pred_fallthru
          _
      $region28: #{lhvqt_forward.1} parent=5 // pred_fallthru
        _
      %p913 = scmp.le.s32.totalorder 2, %s11
      // Predicated region
      $region33: #{lhvqt_forward.1} parent=5 // pred_check
        %p914 = pneg %p913
      $region34: #{lhvqt_forward.1} parent=5 // pred_check_branch
        %916 = sbr.rel (%p914) target = $region36
      $region35: #{lhvqt_forward.1} parent=5 // pred_region
        %s917 = ssub.s32 %s11, 2
        // Predicated region
        $region37: #{lhvqt_forward.1} parent=35 // pred_check
          %p918 = pneg %p103
        $region38: #{lhvqt_forward.1} parent=35 // pred_check_branch
          %920 = sbr.rel (%p918) target = $region40
        $region39: #{lhvqt_forward.1} parent=35 // pred_region
          %s921 = sand.u32 %s88, 1
          %s922 = scalar_lea.sflag [#allocation3], %s921
          %s923 = sand.u32 %s88, 1
          %s924 = smul.addr %s923, 128
          %s925 = scalar_lea.vmem [#allocation2], %s924
          %926 = dma.done %s922, 2048
        $region40: #{lhvqt_forward.1} parent=35 // pred_fallthru
          _
      $region36: #{lhvqt_forward.1} parent=5 // pred_fallthru
        _
    $region6: #{lhvqt_forward.1} parent=1 // loop_footer
      %s15 = sadd.s32 1, %s11
    $region7: #{lhvqt_forward.1} parent=1 // loop_footer_branch
      %10 = sbr.rel target = $region3
    $region8: #{lhvqt_forward.1} parent=1 // loop_exit
      _
    %927 = vsyncpa [#allocation3], 1
    %s928 = scalar_lea.sflag [#allocation3], 1
    %929 = vsyncpa %s928, 1

</llo_original>
